<compile_context>
chip_gen: v7x
topology: tpu7x:2x2x1
jax: 0.10.0
libtpu: 0.0.40
codegen_flags: <defaults>
</compile_context>

<pallas_src>
import functools

import jax
import jax.numpy as jnp
from jax.experimental import pallas as pl
from jax.experimental.pallas import tpu as pltpu

LANES = 128
ACC_ROWS = 8                            # (8, 128) partial-sum block
MAX_TILE_R = 2048                       # up to 2048 rows x 128 lanes per block
TILE_VMEM_BUDGET = 24 * 1024 * 1024     # double-buffered tile budget
VMEM_LIMIT = 32 * 1024 * 1024           # explicit scoped-VMEM limit (v5e default is 16 MiB)


def _round_up(x, m):
    return ((x + m - 1) // m) * m


def _to_slab(x, rs):
    """(N, C, H, W) -> (N, C, rs, 128) lane-major slab (zero-pads only if needed)."""
    n, c = x.shape[0], x.shape[1]
    flat = x.reshape(n, c, -1)
    hw = flat.shape[2]
    pad = rs * LANES - hw
    if pad:
        flat = jnp.pad(flat, ((0, 0), (0, 0), (0, pad)))
    return flat.reshape(n, c, rs, LANES)


def _pick_tile_r(rs, bytes_per_row):
    """Largest multiple-of-8 row tile fitting the double-buffered VMEM budget."""
    cap = TILE_VMEM_BUDGET // (2 * max(bytes_per_row, 1))
    tile = min(MAX_TILE_R, rs, cap)
    return max(8, (tile // 8) * 8)


def _charb_reduce_kernel(*refs, eps, hw, tile_r, nb, need_tail_mask, use_weight):
    """Per-(sample, block) partial sums of charbonnier(pred_merged, ori)[*w]."""
    if use_weight:
        a_ref, fg_ref, bg_ref, ori_ref, w_ref, loss_out, wsum_out = refs
    else:
        a_ref, fg_ref, bg_ref, ori_ref, loss_out = refs
        w_ref = wsum_out = None

    a = a_ref[0, 0].astype(jnp.float32)            # (tile_r, 128)
    fg = fg_ref[0].astype(jnp.float32)             # (3, tile_r, 128)
    bg = bg_ref[0].astype(jnp.float32)
    ori = ori_ref[0].astype(jnp.float32)

    diff = a[None] * fg + (1.0 - a)[None] * bg - ori
    loss = jnp.sqrt(diff * diff + eps)             # (3, tile_r, 128)

    if use_weight:
        w = w_ref[0, 0].astype(jnp.float32)        # (tile_r, 128)
        loss = loss * w[None]

    def _store(mask):
        l = loss if mask is None else jnp.where(mask[None], loss, 0.0)
        loss_out[0, 0] = (l.sum(axis=0)
                          .reshape(tile_r // 8, ACC_ROWS, LANES).sum(axis=0))
        if use_weight:
            ww = w if mask is None else jnp.where(mask, w, 0.0)
            wsum_out[0, 0] = (ww.reshape(tile_r // 8, ACC_ROWS, LANES)
                              .sum(axis=0))

    if need_tail_mask:
        j = pl.program_id(1)

        @pl.when(j == nb - 1)
        def _():
            # Only the last block contains the zero-pad tail / ragged rows.
            row = jax.lax.broadcasted_iota(jnp.int32, (tile_r, LANES), 0)
            lane = jax.lax.broadcasted_iota(jnp.int32, (tile_r, LANES), 1)
            flat = ((nb - 1) * tile_r + row) * LANES + lane
            _store(flat < hw)

        if nb > 1:
            @pl.when(j < nb - 1)
            def _():
                _store(None)
    else:
        _store(None)


def _charb_elem_kernel(*refs, eps, loss_weight, use_weight):
    """reduction='none': emit the full elementwise loss map."""
    if use_weight:
        a_ref, fg_ref, bg_ref, ori_ref, w_ref, out_ref = refs
    else:
        a_ref, fg_ref, bg_ref, ori_ref, out_ref = refs

    a = a_ref[0, 0].astype(jnp.float32)            # (tile_r, 128)
    fg = fg_ref[0].astype(jnp.float32)             # (3, tile_r, 128)
    bg = bg_ref[0].astype(jnp.float32)
    ori = ori_ref[0].astype(jnp.float32)

    diff = a[None] * fg + (1.0 - a)[None] * bg - ori
    loss = jnp.sqrt(diff * diff + eps)
    if use_weight:
        loss = loss * w_ref[0, 0].astype(jnp.float32)[None]
    if loss_weight != 1.0:
        loss = loss * loss_weight
    out_ref[0] = loss.astype(out_ref.dtype)


class CharbonnierCompLoss:
    """JAX/Pallas port of mmagic CharbonnierCompLoss (forward only)."""

    def __init__(self, loss_weight=1.0, reduction='mean',
                 sample_wise=False, eps=1e-12):
        if reduction not in ('none', 'mean', 'sum'):
            raise ValueError(f'Unsupported reduction mode: {reduction}.')
        self.loss_weight = float(loss_weight)
        self.reduction = reduction
        self.sample_wise = sample_wise
        self.eps = float(eps)

    def __call__(self, pred_alpha, fg, bg, ori_merged, weight=None):
        n, _, h, w_dim = fg.shape
        hw = h * w_dim
        use_weight = weight is not None

        rs = _round_up(pl.cdiv(hw, LANES), 8)      # minimal 8-row rounding only

        isz = lambda a: jnp.dtype(a.dtype).itemsize
        bytes_per_row = LANES * (isz(pred_alpha)
                                 + 3 * (isz(fg) + isz(bg) + isz(ori_merged)))
        if use_weight:
            bytes_per_row += LANES * isz(weight)

        if self.reduction == 'none':
            dtypes = [pred_alpha.dtype, fg.dtype, bg.dtype, ori_merged.dtype]
            if use_weight:
                dtypes.append(weight.dtype)
            out_dtype = jnp.result_type(*dtypes)
            bytes_per_row += 3 * LANES * jnp.dtype(out_dtype).itemsize

        tile_r = _pick_tile_r(rs, bytes_per_row)
        nb = pl.cdiv(rs, tile_r)
        need_tail_mask = (nb * tile_r * LANES != hw)

        # Native-dtype slabs; f32 widening happens inside the kernel.
        a_p = _to_slab(pred_alpha, rs)             # (N, 1, rs, 128)
        fg_p = _to_slab(fg, rs)                    # (N, 3, rs, 128)
        bg_p = _to_slab(bg, rs)
        ori_p = _to_slab(ori_merged, rs)
        inputs = [a_p, fg_p, bg_p, ori_p]
        if use_weight:
            inputs.append(_to_slab(weight, rs))    # zero-padded tail

        blk1 = (1, 1, tile_r, LANES)
        blk3 = (1, 3, tile_r, LANES)
        imap = lambda s, j: (s, 0, j, 0)
        in_specs = [pl.BlockSpec(blk1, imap), pl.BlockSpec(blk3, imap),
                    pl.BlockSpec(blk3, imap), pl.BlockSpec(blk3, imap)]
        if use_weight:
            in_specs.append(pl.BlockSpec(blk1, imap))

        elems = n * 3 * rs * LANES
        in_bytes = sum(int(x.size) * jnp.dtype(x.dtype).itemsize for x in inputs)

        if self.reduction == 'none':
            out_bytes = elems * jnp.dtype(out_dtype).itemsize
            cost = pl.CostEstimate(flops=int(9 * elems), transcendentals=int(elems),
                                   bytes_accessed=int(in_bytes + out_bytes))
            out = pl.pallas_call(
                functools.partial(_charb_elem_kernel, eps=self.eps,
                                  loss_weight=self.loss_weight,
                                  use_weight=use_weight),
                out_shape=jax.ShapeDtypeStruct((n, 3, rs, LANES), out_dtype),
                grid_spec=pltpu.PrefetchScalarGridSpec(
                    num_scalar_prefetch=0, grid=(n, nb),
                    in_specs=in_specs,
                    out_specs=pl.BlockSpec(blk3, imap)),
                compiler_params=pltpu.CompilerParams(
                    dimension_semantics=("parallel", "parallel"),
                    vmem_limit_bytes=VMEM_LIMIT),
                cost_estimate=cost,
            )(*inputs)
            out = out.reshape(n, 3, rs * LANES)
            if rs * LANES != hw:                   # only copy back when padded
                out = out[:, :, :hw]
            return out.reshape(n, 3, h, w_dim)

        # ---- reduction = 'mean' | 'sum' ----
        acc_blk = (1, 1, ACC_ROWS, LANES)
        acc_map = lambda s, j: (s, j, 0, 0)
        acc_shape = jax.ShapeDtypeStruct((n, nb, ACC_ROWS, LANES), jnp.float32)

        if use_weight:
            out_shape = (acc_shape, acc_shape)
            out_specs = (pl.BlockSpec(acc_blk, acc_map),
                         pl.BlockSpec(acc_blk, acc_map))
        else:
            out_shape = acc_shape
            out_specs = pl.BlockSpec(acc_blk, acc_map)

        out_bytes = (2 if use_weight else 1) * n * nb * ACC_ROWS * LANES * 4
        cost = pl.CostEstimate(flops=int(10 * elems), transcendentals=int(elems),
                               bytes_accessed=int(in_bytes + out_bytes))

        result = pl.pallas_call(
            functools.partial(_charb_reduce_kernel, eps=self.eps, hw=hw,
                              tile_r=tile_r, nb=nb,
                              need_tail_mask=need_tail_mask,
                              use_weight=use_weight),
            out_shape=out_shape,
            grid_spec=pltpu.PrefetchScalarGridSpec(
                num_scalar_prefetch=0, grid=(n, nb),
                in_specs=in_specs, out_specs=out_specs),
            compiler_params=pltpu.CompilerParams(
                dimension_semantics=("parallel", "parallel"),
                vmem_limit_bytes=VMEM_LIMIT),
            cost_estimate=cost,
        )(*inputs)

        if use_weight:
            loss_part, wsum_part = result
        else:
            loss_part = result

        loss_s = loss_part.sum(axis=(1, 2, 3))     # per-sample sums (N,)

        if self.reduction == 'sum':
            out = loss_s.sum()
        else:  # 'mean'
            if not use_weight:
                out = loss_s.sum() / (n * 3 * hw)  # analytic denominator
            else:
                # weight is accumulated once per tile (1 channel); the PyTorch
                # reference expands it to 3 channels, hence the factor 3.
                w_s = 3.0 * wsum_part.sum(axis=(1, 2, 3))
                if self.sample_wise:
                    out = (loss_s / (w_s + 1e-12)).sum() / n
                else:
                    out = loss_s.sum() / (w_s.sum() + 1e-12)
        return self.loss_weight * out


def _reference(pred_alpha, fg, bg, ori, weight, loss_weight, reduction,
               sample_wise, eps):
    """Pure-JAX reference mirroring the PyTorch semantics."""
    pred_merged = pred_alpha * fg + (1.0 - pred_alpha) * bg
    loss = jnp.sqrt((pred_merged - ori) ** 2 + eps)
    if weight is not None:
        w = jnp.broadcast_to(weight, loss.shape)
        loss = loss * w
    if weight is None or reduction == 'sum':
        if reduction == 'mean':
            loss = loss.mean()
        elif reduction == 'sum':
            loss = loss.sum()
    elif reduction == 'mean':
        w = jnp.broadcast_to(weight, loss.shape)
        if sample_wise:
            ws = w.sum(axis=(1, 2, 3), keepdims=True)
            loss = (loss / (ws + 1e-12)).sum() / w.shape[0]
        else:
            loss = loss.sum() / (w.sum() + 1e-12)
    return loss_weight * loss


if __name__ == "__main__":
    key = jax.random.PRNGKey(0)
    k1, k2, k3, k4, k5 = jax.random.split(key, 5)
    N, H, W = 2, 16, 16

    pred_alpha = jax.nn.sigmoid(jax.random.normal(k1, (N, 1, H, W), jnp.float32))
    fg = jax.random.normal(k2, (N, 3, H, W), jnp.float32)
    bg = jax.random.normal(k3, (N, 3, H, W), jnp.float32)
    ori = jax.random.normal(k4, (N, 3, H, W), jnp.float32)
    weight = (jax.random.uniform(k5, (N, 1, H, W)) > 0.5).astype(jnp.float32)

    ok = True

    # default configuration: reduction='mean', weight=None
    mod = CharbonnierCompLoss(loss_weight=1.0, reduction='mean',
                              sample_wise=False, eps=1e-12)
    out = jax.block_until_ready(mod(pred_alpha, fg, bg, ori))
    ref = _reference(pred_alpha, fg, bg, ori, None, 1.0, 'mean', False, 1e-12)
    ok &= bool(jnp.allclose(out, ref, rtol=1e-5, atol=1e-6))

    # reduction='sum', weight=None
    mod_s = CharbonnierCompLoss(loss_weight=1.0, reduction='sum', eps=1e-12)
    out_s = jax.block_until_ready(mod_s(pred_alpha, fg, bg, ori))
    ref_s = _reference(pred_alpha, fg, bg, ori, None, 1.0, 'sum', False, 1e-12)
    ok &= bool(jnp.allclose(out_s, ref_s, rtol=1e-5, atol=1e-5))

    # weighted mean, sample_wise=True
    mod2 = CharbonnierCompLoss(loss_weight=0.5, reduction='mean',
                               sample_wise=True, eps=1e-6)
    out2 = jax.block_until_ready(mod2(pred_alpha, fg, bg, ori, weight))
    ref2 = _reference(pred_alpha, fg, bg, ori, weight, 0.5, 'mean', True, 1e-6)
    ok &= bool(jnp.allclose(out2, ref2, rtol=1e-5, atol=1e-6))

    # weighted mean, sample_wise=False
    mod2b = CharbonnierCompLoss(loss_weight=1.0, reduction='mean',
                                sample_wise=False, eps=1e-6)
    out2b = jax.block_until_ready(mod2b(pred_alpha, fg, bg, ori, weight))
    ref2b = _reference(pred_alpha, fg, bg, ori, weight, 1.0, 'mean', False, 1e-6)
    ok &= bool(jnp.allclose(out2b, ref2b, rtol=1e-5, atol=1e-6))

    # reduction='none', weighted
    mod3 = CharbonnierCompLoss(loss_weight=2.0, reduction='none', eps=1e-12)
    out3 = jax.block_until_ready(mod3(pred_alpha, fg, bg, ori, weight))
    ref3 = _reference(pred_alpha, fg, bg, ori, weight, 2.0, 'none', False, 1e-12)
    ok &= bool(jnp.allclose(out3, ref3, rtol=1e-5, atol=1e-6))

    # non-128-aligned H*W (exercises the last-block tail mask)
    Hh, Ww = 7, 9
    pa2 = jax.nn.sigmoid(jax.random.normal(k1, (1, 1, Hh, Ww), jnp.float32))
    fg2 = jax.random.normal(k2, (1, 3, Hh, Ww), jnp.float32)
    bg2 = jax.random.normal(k3, (1, 3, Hh, Ww), jnp.float32)
    or2 = jax.random.normal(k4, (1, 3, Hh, Ww), jnp.float32)
    mod4 = CharbonnierCompLoss(loss_weight=1.0, reduction='mean', eps=1e-12)
    out4 = jax.block_until_ready(mod4(pa2, fg2, bg2, or2))
    ref4 = _reference(pa2, fg2, bg2, or2, None, 1.0, 'mean', False, 1e-12)
    ok &= bool(jnp.allclose(out4, ref4, rtol=1e-5, atol=1e-6))

    if ok:
        print("KERNEL_OK")
    else:
        raise SystemExit("mismatch vs reference")
</pallas_src>

<mosaic_0001>
module attributes {stable_mosaic.version = 11 : i64} {
  func.func @_charb_reduce_kernel(%arg0: i32, %arg1: i32, %arg2: memref<1x1x8x128xf32, #tpu.memory_space<vmem>>, %arg3: memref<1x3x8x128xf32, #tpu.memory_space<vmem>>, %arg4: memref<1x3x8x128xf32, #tpu.memory_space<vmem>>, %arg5: memref<1x3x8x128xf32, #tpu.memory_space<vmem>>, %arg6: memref<1x1x8x128xf32, #tpu.memory_space<vmem>>) attributes {dimension_semantics = [#tpu.dimension_semantics<parallel>, #tpu.dimension_semantics<parallel>], iteration_bounds = array<i64: 2, 1>, scalar_prefetch = 0 : i64, scratch_operands = 0 : i64, tpu.core_type = #tpu.core_type<tc>, window_params = [{transform_indices = @transform_0, window_bounds = array<i64: 1, 1, 8, 128>}, {transform_indices = @transform_1, window_bounds = array<i64: 1, 3, 8, 128>}, {transform_indices = @transform_2, window_bounds = array<i64: 1, 3, 8, 128>}, {transform_indices = @transform_3, window_bounds = array<i64: 1, 3, 8, 128>}, {transform_indices = @transform_4, window_bounds = array<i64: 1, 1, 8, 128>}]} {
    %c0 = arith.constant 0 : index
    %c0_0 = arith.constant 0 : index
    %c0_1 = arith.constant 0 : index
    %c0_2 = arith.constant 0 : index
    %0 = vector.load %arg2[%c0, %c0_0, %c0_1, %c0_2] : memref<1x1x8x128xf32, #tpu.memory_space<vmem>>, vector<1x1x8x128xf32>
    %1 = vector.shape_cast %0 : vector<1x1x8x128xf32> to vector<8x128xf32>
    %c0_3 = arith.constant 0 : index
    %c0_4 = arith.constant 0 : index
    %c0_5 = arith.constant 0 : index
    %c0_6 = arith.constant 0 : index
    %2 = vector.load %arg3[%c0_3, %c0_4, %c0_5, %c0_6] : memref<1x3x8x128xf32, #tpu.memory_space<vmem>>, vector<1x3x8x128xf32>
    %3 = vector.shape_cast %2 : vector<1x3x8x128xf32> to vector<3x8x128xf32>
    %c0_7 = arith.constant 0 : index
    %c0_8 = arith.constant 0 : index
    %c0_9 = arith.constant 0 : index
    %c0_10 = arith.constant 0 : index
    %4 = vector.load %arg4[%c0_7, %c0_8, %c0_9, %c0_10] : memref<1x3x8x128xf32, #tpu.memory_space<vmem>>, vector<1x3x8x128xf32>
    %5 = vector.shape_cast %4 : vector<1x3x8x128xf32> to vector<3x8x128xf32>
    %c0_11 = arith.constant 0 : index
    %c0_12 = arith.constant 0 : index
    %c0_13 = arith.constant 0 : index
    %c0_14 = arith.constant 0 : index
    %6 = vector.load %arg5[%c0_11, %c0_12, %c0_13, %c0_14] : memref<1x3x8x128xf32, #tpu.memory_space<vmem>>, vector<1x3x8x128xf32>
    %7 = vector.shape_cast %6 : vector<1x3x8x128xf32> to vector<3x8x128xf32>
    %8 = vector.shape_cast %1 : vector<8x128xf32> to vector<1x8x128xf32>
    %9 = vector.broadcast %8 : vector<1x8x128xf32> to vector<3x8x128xf32>
    %10 = arith.mulf %9, %3 : vector<3x8x128xf32>
    %cst = arith.constant 1.000000e+00 : f32
    %11 = vector.broadcast %cst : f32 to vector<8x128xf32>
    %12 = arith.subf %11, %1 : vector<8x128xf32>
    %13 = vector.shape_cast %12 : vector<8x128xf32> to vector<1x8x128xf32>
    %14 = vector.broadcast %13 : vector<1x8x128xf32> to vector<3x8x128xf32>
    %15 = arith.mulf %14, %5 : vector<3x8x128xf32>
    %16 = arith.addf %10, %15 : vector<3x8x128xf32>
    %17 = arith.subf %16, %7 : vector<3x8x128xf32>
    %18 = arith.mulf %17, %17 : vector<3x8x128xf32>
    %cst_15 = arith.constant 9.99999996E-13 : f32
    %19 = vector.broadcast %cst_15 : f32 to vector<3x8x128xf32>
    %20 = arith.addf %18, %19 : vector<3x8x128xf32>
    %21 = math.sqrt %20 : vector<3x8x128xf32>
    %c0_i32 = arith.constant 0 : i32
    %22 = arith.cmpi eq, %arg1, %c0_i32 : i32
    %23 = arith.extui %22 : i1 to i32
    %c0_i32_16 = arith.constant 0 : i32
    %24 = arith.cmpi ne, %23, %c0_i32_16 : i32
    scf.if %24 {
      %25 = tpu.iota {dimensions = array<i32: 0>} : vector<8x128xi32>
      %26 = tpu.iota {dimensions = array<i32: 1>} : vector<8x128xi32>
      %c0_i32_17 = arith.constant 0 : i32
      %27 = vector.broadcast %c0_i32_17 : i32 to vector<8x128xi32>
      %28 = arith.addi %27, %25 : vector<8x128xi32>
      %c128_i32 = arith.constant 128 : i32
      %29 = vector.broadcast %c128_i32 : i32 to vector<8x128xi32>
      %30 = arith.muli %28, %29 : vector<8x128xi32>
      %31 = arith.addi %30, %26 : vector<8x128xi32>
      %c256_i32 = arith.constant 256 : i32
      %32 = vector.broadcast %c256_i32 : i32 to vector<8x128xi32>
      %33 = arith.cmpi slt, %31, %32 : vector<8x128xi32>
      %34 = vector.shape_cast %33 : vector<8x128xi1> to vector<1x8x128xi1>
      %cst_18 = arith.constant 0.000000e+00 : f32
      %35 = vector.shape_cast %34 : vector<1x8x128xi1> to vector<1x8x128xi1>
      %36 = vector.broadcast %35 : vector<1x8x128xi1> to vector<3x8x128xi1>
      %37 = vector.broadcast %cst_18 : f32 to vector<3x8x128xf32>
      %38 = arith.select %36, %21, %37 : vector<3x8x128xi1>, vector<3x8x128xf32>
      %cst_19 = arith.constant dense<0.000000e+00> : vector<8x128xf32>
      %39 = vector.multi_reduction <add>, %38, %cst_19 [0] : vector<3x8x128xf32> to vector<8x128xf32>
      %40 = vector.shape_cast %39 : vector<8x128xf32> to vector<1x8x128xf32>
      %cst_20 = arith.constant dense<0.000000e+00> : vector<8x128xf32>
      %41 = vector.multi_reduction <add>, %40, %cst_20 [0] : vector<1x8x128xf32> to vector<8x128xf32>
      %c0_21 = arith.constant 0 : index
      %c0_22 = arith.constant 0 : index
      %c0_23 = arith.constant 0 : index
      %c0_24 = arith.constant 0 : index
      %42 = vector.load %arg6[%c0_21, %c0_22, %c0_23, %c0_24] : memref<1x1x8x128xf32, #tpu.memory_space<vmem>>, vector<1x1x8x128xf32>
      %43 = vector.shape_cast %42 : vector<1x1x8x128xf32> to vector<8x128xf32>
      %44 = vector.shape_cast %41 : vector<8x128xf32> to vector<1x1x8x128xf32>
      tpu.vector_store %arg6[%c0_21, %c0_22, %c0_23, %c0_24], %44 {strides = array<i32>} : memref<1x1x8x128xf32, #tpu.memory_space<vmem>>, vector<1x1x8x128xf32>,
    } else {
    }
    return
  }
  func.func @transform_0(%arg0: i32, %arg1: i32) -> (i32, i32, i32, i32) {
    %c0_i32 = arith.constant 0 : i32
    %c0_i32_0 = arith.constant 0 : i32
    %c0_i32_1 = arith.constant 0 : i32
    return %arg0, %c0_i32, %arg1, %c0_i32_0 : i32, i32, i32, i32
  }
  func.func @transform_1(%arg0: i32, %arg1: i32) -> (i32, i32, i32, i32) {
    %c0_i32 = arith.constant 0 : i32
    %c0_i32_0 = arith.constant 0 : i32
    %c0_i32_1 = arith.constant 0 : i32
    return %arg0, %c0_i32, %arg1, %c0_i32_0 : i32, i32, i32, i32
  }
  func.func @transform_2(%arg0: i32, %arg1: i32) -> (i32, i32, i32, i32) {
    %c0_i32 = arith.constant 0 : i32
    %c0_i32_0 = arith.constant 0 : i32
    %c0_i32_1 = arith.constant 0 : i32
    return %arg0, %c0_i32, %arg1, %c0_i32_0 : i32, i32, i32, i32
  }
  func.func @transform_3(%arg0: i32, %arg1: i32) -> (i32, i32, i32, i32) {
    %c0_i32 = arith.constant 0 : i32
    %c0_i32_0 = arith.constant 0 : i32
    %c0_i32_1 = arith.constant 0 : i32
    return %arg0, %c0_i32, %arg1, %c0_i32_0 : i32, i32, i32, i32
  }
  func.func @transform_4(%arg0: i32, %arg1: i32) -> (i32, i32, i32, i32) {
    %c0_i32 = arith.constant 0 : i32
    %c0_i32_0 = arith.constant 0 : i32
    %c0_i32_1 = arith.constant 0 : i32
    return %arg0, %arg1, %c0_i32, %c0_i32_0 : i32, i32, i32, i32
  }
}

</mosaic_0001>

<llo_original>
// kernel: tpu_custom_call.1
$region0: #{tpu_custom_call.1}
  #allocation0 [shape = 'u32[]', space=smem, size = 0x4, offset = 0x4, fixed_abs, tag = 'smem constant byte address 0x4 - core index']
  #allocation1 [shape = 'u32[144,128]{1,0:T(1,128)}', space=vmem, size = 0x12000, scoped, tag = 'internal scratch']
  %s0 = inlined_call_operand.hbm [shape: f32[2,1,8,128], index: 0, kind: input, shape index: {}]
  %s1 = inlined_call_operand.hbm [shape: f32[2,3,8,128], index: 1, kind: input, shape index: {}]
  %s2 = inlined_call_operand.hbm [shape: f32[2,3,8,128], index: 2, kind: input, shape index: {}]
  %s3 = inlined_call_operand.hbm [shape: f32[2,3,8,128], index: 3, kind: input, shape index: {}]
  %s4 = inlined_call_operand.hbm [shape: f32[2,1,8,128], index: 4, kind: output, shape index: {}]
  %s5 = sld [smem:[#allocation0]]
  $region69: #{tpu_custom_call.1} parent=0
    _
  %s7 = ssub.s32 1, %s5
  %s8 = scalar_select 0, %s7, %s5
  $region1: #{tpu_custom_call.1} parent=0
    #allocation2 [shape = 'u8[8192]{0}', space=vmem, size = 0x2000, scoped, tag = 'input window, operand 0']
    #allocation3 [shape = 's32[2]{0}', space=sflag, size = 0x8, scoped, tag = 'scoped memory for tpu_custom_call.1']
    #allocation4 [shape = 's32[2]{0}', space=sflag, size = 0x8, scoped, tag = 'scoped memory for tpu_custom_call.1']
    #allocation5 [shape = 'u8[24576]{0}', space=vmem, size = 0x6000, scoped, tag = 'input window, operand 1']
    #allocation6 [shape = 's32[2]{0}', space=sflag, size = 0x8, scoped, tag = 'scoped memory for tpu_custom_call.1']
    #allocation7 [shape = 'u8[24576]{0}', space=vmem, size = 0x6000, scoped, tag = 'input window, operand 2']
    #allocation8 [shape = 'u8[24576]{0}', space=vmem, size = 0x6000, scoped, tag = 'input window, operand 3']
    #allocation9 [shape = 's32[2]{0}', space=sflag, size = 0x8, scoped, tag = 'scoped memory for tpu_custom_call.1']
    #allocation10 [shape = 'u8[8192]{0}', space=vmem, size = 0x2000, scoped, tag = 'output window, operand 0']
    %9 = vsyncpa [#allocation3], 0
    %s10 = scalar_lea.sflag [#allocation3], 1
    %11 = vsyncpa %s10, 0
    %12 = vsyncpa [#allocation6], 0
    %s13 = scalar_lea.sflag [#allocation6], 1
    %14 = vsyncpa %s13, 0
    %15 = vsyncpa [#allocation9], 0
    %s16 = scalar_lea.sflag [#allocation9], 1
    %17 = vsyncpa %s16, 0
    %18 = vsyncpa [#allocation4], 0
    %s19 = scalar_lea.sflag [#allocation4], 1
    %20 = vsyncpa %s19, 0
    loop: start=0, step=1, limit=4
    $region2: #{tpu_custom_call.1} parent=1 // loop_pre_header
      _
    $region3: #{tpu_custom_call.1} parent=1 // loop_header
      %s22 = sphi 0, %s26
      %p23 = scmp.ge.s32.totalorder %s22, 4
      %s29 = sphi 0, %s41
      %s30 = sphi 0, %s37
      %s31 = sphi 0, %s29
      %s32 = sphi 0, %s30
      %s33 = sphi 0, %s31
      %s34 = sphi 0, %s32
      %s46 = sphi 0, %s48
      %s49 = sphi 0, %s46
      %s50 = sphi 0, %s49
      %s66 = sphi 0, %s50
      %s74 = sphi 0, %s76
      %s77 = sphi 0, %s74
      %s78 = sphi 0, %s77
      %s94 = sphi 0, %s78
      %s102 = sphi 0, %s104
      %s105 = sphi 0, %s102
      %s106 = sphi 0, %s105
      %s122 = sphi 0, %s106
      %s130 = sphi 0, %s132
      %s133 = sphi 0, %s130
      %s134 = sphi 0, %s133
      %s150 = sphi 0, %s134
      %s158 = sphi 0, %s160
      %s161 = sphi 0, %s158
      %s162 = sphi 0, %s161
      %s178 = sphi 0, %s162
    $region4: #{tpu_custom_call.1} parent=1 // loop_header_branch
      %25 = sbr.rel (%p23) target = $region8
    $region5: #{tpu_custom_call.1} parent=1 // loop_body
      %s27 = ssub.s32 %s22, 1
      %s28 = ssub.s32 %s22, 2
      %s35 = sadd.s32 1, %s30
      %p36 = scmp.ge.s32.totalorder %s35, 1
      %s37 = scalar_select %p36, 0, %s35
      %s38 = sadd.s32 1, %s29
      %s39 = scalar_select %p36, %s38, %s29
      %p40 = scmp.ge.s32.totalorder %s39, 2
      %s41 = scalar_select %p40, 0, %s39
      %s42 = ssub.s32 %s29, %s41
      %s43 = ssub.s32 %s30, %s37
      %s44 = sor.u32 %s42, %s43
      %p45 = scmp.eq.s32.totalorder %s44, 0
      %s47 = sadd.s32 %s46, 1
      %s48 = scalar_select %p45, %s46, %s47
      %p51 = pneg %p45
      %p52 = scmp.eq.s32.totalorder %s22, 1
      %p53 = por %p51, %p52
      %p54 = scmp.ne.s32.totalorder %s46, %s49
      %p55 = scmp.eq.s32.totalorder %s22, 0
      %p56 = por %p54, %p55
      %p57 = scmp.ne.s32.totalorder %s46, %s49
      %p58 = scmp.eq.s32.totalorder %s27, 1
      %p59 = por %p57, %p58
      %p60 = scmp.ne.s32.totalorder %s49, %s50
      %p61 = scmp.eq.s32.totalorder %s27, 0
      %p62 = por %p60, %p61
      %p63 = scmp.ne.s32.totalorder %s49, %s50
      %p64 = scmp.eq.s32.totalorder %s28, 1
      %p65 = por %p63, %p64
      %p67 = scmp.ne.s32.totalorder %s50, %s66
      %p68 = scmp.eq.s32.totalorder %s28, 0
      %p69 = por %p67, %p68
      %s70 = ssub.s32 %s29, %s41
      %s71 = ssub.s32 %s30, %s37
      %s72 = sor.u32 %s70, %s71
      %p73 = scmp.eq.s32.totalorder %s72, 0
      %s75 = sadd.s32 %s74, 1
      %s76 = scalar_select %p73, %s74, %s75
      %p79 = pneg %p73
      %p80 = scmp.eq.s32.totalorder %s22, 1
      %p81 = por %p79, %p80
      %p82 = scmp.ne.s32.totalorder %s74, %s77
      %p83 = scmp.eq.s32.totalorder %s22, 0
      %p84 = por %p82, %p83
      %p85 = scmp.ne.s32.totalorder %s74, %s77
      %p86 = scmp.eq.s32.totalorder %s27, 1
      %p87 = por %p85, %p86
      %p88 = scmp.ne.s32.totalorder %s77, %s78
      %p89 = scmp.eq.s32.totalorder %s27, 0
      %p90 = por %p88, %p89
      %p91 = scmp.ne.s32.totalorder %s77, %s78
      %p92 = scmp.eq.s32.totalorder %s28, 1
      %p93 = por %p91, %p92
      %p95 = scmp.ne.s32.totalorder %s78, %s94
      %p96 = scmp.eq.s32.totalorder %s28, 0
      %p97 = por %p95, %p96
      %s98 = ssub.s32 %s29, %s41
      %s99 = ssub.s32 %s30, %s37
      %s100 = sor.u32 %s98, %s99
      %p101 = scmp.eq.s32.totalorder %s100, 0
      %s103 = sadd.s32 %s102, 1
      %s104 = scalar_select %p101, %s102, %s103
      %p107 = pneg %p101
      %p108 = scmp.eq.s32.totalorder %s22, 1
      %p109 = por %p107, %p108
      %p110 = scmp.ne.s32.totalorder %s102, %s105
      %p111 = scmp.eq.s32.totalorder %s22, 0
      %p112 = por %p110, %p111
      %p113 = scmp.ne.s32.totalorder %s102, %s105
      %p114 = scmp.eq.s32.totalorder %s27, 1
      %p115 = por %p113, %p114
      %p116 = scmp.ne.s32.totalorder %s105, %s106
      %p117 = scmp.eq.s32.totalorder %s27, 0
      %p118 = por %p116, %p117
      %p119 = scmp.ne.s32.totalorder %s105, %s106
      %p120 = scmp.eq.s32.totalorder %s28, 1
      %p121 = por %p119, %p120
      %p123 = scmp.ne.s32.totalorder %s106, %s122
      %p124 = scmp.eq.s32.totalorder %s28, 0
      %p125 = por %p123, %p124
      %s126 = ssub.s32 %s29, %s41
      %s127 = ssub.s32 %s30, %s37
      %s128 = sor.u32 %s126, %s127
      %p129 = scmp.eq.s32.totalorder %s128, 0
      %s131 = sadd.s32 %s130, 1
      %s132 = scalar_select %p129, %s130, %s131
      %p135 = pneg %p129
      %p136 = scmp.eq.s32.totalorder %s22, 1
      %p137 = por %p135, %p136
      %p138 = scmp.ne.s32.totalorder %s130, %s133
      %p139 = scmp.eq.s32.totalorder %s22, 0
      %p140 = por %p138, %p139
      %p141 = scmp.ne.s32.totalorder %s130, %s133
      %p142 = scmp.eq.s32.totalorder %s27, 1
      %p143 = por %p141, %p142
      %p144 = scmp.ne.s32.totalorder %s133, %s134
      %p145 = scmp.eq.s32.totalorder %s27, 0
      %p146 = por %p144, %p145
      %p147 = scmp.ne.s32.totalorder %s133, %s134
      %p148 = scmp.eq.s32.totalorder %s28, 1
      %p149 = por %p147, %p148
      %p151 = scmp.ne.s32.totalorder %s134, %s150
      %p152 = scmp.eq.s32.totalorder %s28, 0
      %p153 = por %p151, %p152
      %s154 = ssub.s32 %s29, %s41
      %s155 = ssub.s32 %s30, %s37
      %s156 = sor.u32 %s154, %s155
      %p157 = scmp.eq.s32.totalorder %s156, 0
      %s159 = sadd.s32 %s158, 1
      %s160 = scalar_select %p157, %s158, %s159
      %p163 = pneg %p157
      %p164 = scmp.eq.s32.totalorder %s22, 1
      %p165 = por %p163, %p164
      %p166 = scmp.ne.s32.totalorder %s158, %s161
      %p167 = scmp.eq.s32.totalorder %s22, 0
      %p168 = por %p166, %p167
      %p169 = scmp.ne.s32.totalorder %s158, %s161
      %p170 = scmp.eq.s32.totalorder %s27, 1
      %p171 = por %p169, %p170
      %p172 = scmp.ne.s32.totalorder %s161, %s162
      %p173 = scmp.eq.s32.totalorder %s27, 0
      %p174 = por %p172, %p173
      %p175 = scmp.ne.s32.totalorder %s161, %s162
      %p176 = scmp.eq.s32.totalorder %s28, 1
      %p177 = por %p175, %p176
      %p179 = scmp.ne.s32.totalorder %s162, %s178
      %p180 = scmp.eq.s32.totalorder %s28, 0
      %p181 = por %p179, %p180
      %p182 = scmp.le.s32.totalorder 1, %s22
      %p183 = scmp.lt.s32.totalorder %s22, 3
      %p184 = pnand %p182, %p183
      %p185 = pneg %p184
      // Predicated region
      $region9: #{tpu_custom_call.1} parent=5 // pred_check
        _
      $region10: #{tpu_custom_call.1} parent=5 // pred_check_branch
        %187 = sbr.rel (%p184) target = $region12
      $region11: #{tpu_custom_call.1} parent=5 // pred_region
        %s188 = ssub.s32 %s22, 1
      $region12: #{tpu_custom_call.1} parent=5 // pred_fallthru
        _
      %p189 = scmp.lt.s32.totalorder %s22, 2
      // Predicated region
      $region13: #{tpu_custom_call.1} parent=5 // pred_check
        %p190 = pneg %p189
      $region14: #{tpu_custom_call.1} parent=5 // pred_check_branch
        %192 = sbr.rel (%p190) target = $region16
      $region15: #{tpu_custom_call.1} parent=5 // pred_region
        // Predicated region
        $region17: #{tpu_custom_call.1} parent=15 // pred_check
          %p193 = pneg %p56
        $region18: #{tpu_custom_call.1} parent=15 // pred_check_branch
          %195 = sbr.rel (%p193) target = $region20
        $region19: #{tpu_custom_call.1} parent=15 // pred_region
          %s196 = sand.u32 %s46, 1
          %s197 = scalar_lea.sflag [#allocation3], %s196
          %s198 = sand.u32 %s46, 1
          %s199 = smul.addr %s198, 8
          %s200 = scalar_lea.vmem [#allocation2], %s199
          %s202 = ssub.s32 128, 128
          %203 = vsyncadd %s197, %s202
          %s204 = sadd.s32 %s30, %s29
          %s205 = smul.addr %s204, 128
          %s206 = scalar_lea.hbm %s0, %s205
          %s208 = sshll.u32 %s200, 4
          %s209 = int_to_ptr.vmem [resolvable:$true] %s208
          %211 = dma.hbm_to_vmem [thread:$0]  %s206, 128, %s209, %s197
        $region20: #{tpu_custom_call.1} parent=15 // pred_fallthru
          _
        // Predicated region
        $region21: #{tpu_custom_call.1} parent=15 // pred_check
          %p212 = pneg %p84
        $region22: #{tpu_custom_call.1} parent=15 // pred_check_branch
          %214 = sbr.rel (%p212) target = $region24
        $region23: #{tpu_custom_call.1} parent=15 // pred_region
          %s215 = sand.u32 %s22, 1
          %s216 = scalar_lea.sflag [#allocation6], %s215
          %s217 = sand.u32 %s74, 1
          %s218 = smul.addr %s217, 24
          %s219 = scalar_lea.vmem [#allocation5], %s218
          %s221 = ssub.s32 384, 384
          %222 = vsyncadd %s216, %s221
          %s223 = smul.addr %s29, 3
          %s224 = sadd.s32 %s30, %s223
          %s225 = smul.addr %s224, 128
          %s226 = scalar_lea.hbm %s1, %s225
          %s227 = sshll.u32 %s219, 4
          %s228 = int_to_ptr.vmem [resolvable:$true] %s227
          %233 = dma.hbm_to_vmem [thread:$0]  %s226, 384, %s228, %s216, 128, 128, 8
        $region24: #{tpu_custom_call.1} parent=15 // pred_fallthru
          _
        // Predicated region
        $region25: #{tpu_custom_call.1} parent=15 // pred_check
          %p234 = pneg %p112
        $region26: #{tpu_custom_call.1} parent=15 // pred_check_branch
          %236 = sbr.rel (%p234) target = $region28
        $region27: #{tpu_custom_call.1} parent=15 // pred_region
          %s237 = sand.u32 %s22, 1
          %s238 = scalar_lea.sflag [#allocation6], %s237
          %s239 = sand.u32 %s102, 1
          %s240 = smul.addr %s239, 24
          %s241 = scalar_lea.vmem [#allocation7], %s240
          %s243 = ssub.s32 384, 384
          %244 = vsyncadd %s238, %s243
          %s245 = smul.addr %s29, 3
          %s246 = sadd.s32 %s30, %s245
          %s247 = smul.addr %s246, 128
          %s248 = scalar_lea.hbm %s2, %s247
          %s249 = sshll.u32 %s241, 4
          %s250 = int_to_ptr.vmem [resolvable:$true] %s249
          %255 = dma.hbm_to_vmem [thread:$0]  %s248, 384, %s250, %s238, 128, 128, 8
        $region28: #{tpu_custom_call.1} parent=15 // pred_fallthru
          _
        // Predicated region
        $region29: #{tpu_custom_call.1} parent=15 // pred_check
          %p256 = pneg %p140
        $region30: #{tpu_custom_call.1} parent=15 // pred_check_branch
          %258 = sbr.rel (%p256) target = $region32
        $region31: #{tpu_custom_call.1} parent=15 // pred_region
          %s259 = sand.u32 %s130, 1
          %s260 = scalar_lea.sflag [#allocation9], %s259
          %s261 = sand.u32 %s130, 1
          %s262 = smul.addr %s261, 24
          %s263 = scalar_lea.vmem [#allocation8], %s262
          %s265 = ssub.s32 384, 384
          %266 = vsyncadd %s260, %s265
          %s267 = smul.addr %s29, 3
          %s268 = sadd.s32 %s30, %s267
          %s269 = smul.addr %s268, 128
          %s270 = scalar_lea.hbm %s3, %s269
          %s271 = sshll.u32 %s263, 4
          %s272 = int_to_ptr.vmem [resolvable:$true] %s271
          %277 = dma.hbm_to_vmem [thread:$0]  %s270, 384, %s272, %s260, 128, 128, 8
        $region32: #{tpu_custom_call.1} parent=15 // pred_fallthru
          _
      $region16: #{tpu_custom_call.1} parent=5 // pred_fallthru
        _
      %p278 = scmp.le.s32.totalorder 1, %s22
      %p279 = scmp.lt.s32.totalorder %s22, 3
      %p280 = pnand %p278, %p279
      %p281 = pneg %p280
      // Predicated region
      $region33: #{tpu_custom_call.1} parent=5 // pred_check
        _
      $region34: #{tpu_custom_call.1} parent=5 // pred_check_branch
        %283 = sbr.rel (%p280) target = $region36
      $region35: #{tpu_custom_call.1} parent=5 // pred_region
        %s284 = ssub.s32 %s22, 1
        %s285 = sand.u32 %s49, 1
        %s286 = scalar_lea.sflag [#allocation3], %s285
        %s287 = sand.u32 %s49, 1
        %s288 = smul.addr %s287, 8
        %s289 = scalar_lea.vmem [#allocation2], %s288
        // Predicated region
        $region37: #{tpu_custom_call.1} parent=35 // pred_check
          %p290 = pneg %p62
        $region38: #{tpu_custom_call.1} parent=35 // pred_check_branch
          %292 = sbr.rel (%p290) target = $region40
        $region39: #{tpu_custom_call.1} parent=35 // pred_region
          %293 = dma.done %s286, 128
        $region40: #{tpu_custom_call.1} parent=35 // pred_fallthru
          _
        %s294 = sand.u32 %s27, 1
        %s295 = scalar_lea.sflag [#allocation6], %s294
        %s296 = sand.u32 %s77, 1
        %s297 = smul.addr %s296, 24
        %s298 = scalar_lea.vmem [#allocation5], %s297
        // Predicated region
        $region41: #{tpu_custom_call.1} parent=35 // pred_check
          %p299 = pneg %p90
        $region42: #{tpu_custom_call.1} parent=35 // pred_check_branch
          %301 = sbr.rel (%p299) target = $region44
        $region43: #{tpu_custom_call.1} parent=35 // pred_region
          %302 = dma.done %s295, 384
        $region44: #{tpu_custom_call.1} parent=35 // pred_fallthru
          _
        %s303 = sand.u32 %s27, 1
        %s304 = scalar_lea.sflag [#allocation6], %s303
        %s305 = sand.u32 %s105, 1
        %s306 = smul.addr %s305, 24
        %s307 = scalar_lea.vmem [#allocation7], %s306
        // Predicated region
        $region45: #{tpu_custom_call.1} parent=35 // pred_check
          %p308 = pneg %p118
        $region46: #{tpu_custom_call.1} parent=35 // pred_check_branch
          %310 = sbr.rel (%p308) target = $region48
        $region47: #{tpu_custom_call.1} parent=35 // pred_region
          %311 = dma.done %s304, 384
        $region48: #{tpu_custom_call.1} parent=35 // pred_fallthru
          _
        %s312 = sand.u32 %s133, 1
        %s313 = scalar_lea.sflag [#allocation9], %s312
        %s314 = sand.u32 %s133, 1
        %s315 = smul.addr %s314, 24
        %s316 = scalar_lea.vmem [#allocation8], %s315
        // Predicated region
        $region49: #{tpu_custom_call.1} parent=35 // pred_check
          %p317 = pneg %p146
        $region50: #{tpu_custom_call.1} parent=35 // pred_check_branch
          %319 = sbr.rel (%p317) target = $region52
        $region51: #{tpu_custom_call.1} parent=35 // pred_region
          %320 = dma.done %s313, 384
        $region52: #{tpu_custom_call.1} parent=35 // pred_fallthru
          _
        %s321 = sand.u32 %s49, 1
        %s322 = scalar_lea.sflag [#allocation3], %s321
        %s323 = sand.u32 %s49, 1
        %s324 = smul.addr %s323, 8
        %s325 = scalar_lea.vmem [#allocation2], %s324
        %p326 = pneg %p62
        %p327 = pneg %p59
        %s328 = sand.u32 %s27, 1
        %s329 = scalar_lea.sflag [#allocation6], %s328
        %s330 = sand.u32 %s77, 1
        %s331 = smul.addr %s330, 24
        %s332 = scalar_lea.vmem [#allocation5], %s331
        %p333 = pneg %p90
        %p334 = pneg %p87
        %s335 = sand.u32 %s27, 1
        %s336 = scalar_lea.sflag [#allocation6], %s335
        %s337 = sand.u32 %s105, 1
        %s338 = smul.addr %s337, 24
        %s339 = scalar_lea.vmem [#allocation7], %s338
        %p340 = pneg %p118
        %p341 = pneg %p115
        %s342 = sand.u32 %s133, 1
        %s343 = scalar_lea.sflag [#allocation9], %s342
        %s344 = sand.u32 %s133, 1
        %s345 = smul.addr %s344, 24
        %s346 = scalar_lea.vmem [#allocation8], %s345
        %p347 = pneg %p146
        %p348 = pneg %p143
        %p349 = pneg %p174
        %p350 = pneg %p171
        %s351 = sand.u32 %s161, 1
        %s352 = scalar_lea.sflag [#allocation4], %s351
        %s353 = sand.u32 %s161, 1
        %s354 = smul.addr %s353, 8
        %s355 = scalar_lea.vmem [#allocation10], %s354
        %v356 = vld [vmem:[%s289] sm:$0xff]
        %v357 = vld [vmem:[%s298] sm:$0xff]
        %v358 = vld [vmem:[%s298 + $0x8] sm:$0xff]
        %v359 = vld [vmem:[%s298 + $0x10] sm:$0xff]
        %v360 = vld [vmem:[%s307] sm:$0xff]
        %v361 = vld [vmem:[%s307 + $0x8] sm:$0xff]
        %v362 = vld [vmem:[%s307 + $0x10] sm:$0xff]
        %v363 = vld [vmem:[%s316] sm:$0xff]
        %v364 = vld [vmem:[%s316 + $0x8] sm:$0xff]
        %v365 = vld [vmem:[%s316 + $0x10] sm:$0xff]
        %v366 = vmul.f32 %v356, %v357
        %v367 = vmul.f32 %v356, %v358
        %v368 = vmul.f32 %v356, %v359
        %v369 = vsub.f32 1.0, %v356
        %v370 = vmul.f32 %v369, %v360
        %v371 = vmul.f32 %v369, %v361
        %v372 = vmul.f32 %v369, %v362
        %v373 = vadd.f32 %v366, %v370
        %v374 = vadd.f32 %v367, %v371
        %v375 = vadd.f32 %v368, %v372
        %v376 = vsub.f32 %v373, %v363
        %v377 = vsub.f32 %v374, %v364
        %v378 = vsub.f32 %v375, %v365
        %v379 = vmul.f32 %v376, %v376
        %v380 = vmul.f32 %v377, %v377
        %v381 = vmul.f32 %v378, %v378
        %v382 = vadd.f32 %v379, 1e-12
        %v383 = vadd.f32 %v380, 1e-12
        %v384 = vadd.f32 %v381, 1e-12
        %v385 = vrsqrt.pop %v382
        %v386 = vmul.f32 %v382, %v385
        %vm387 = vcmp.eq.f32.partialorder %v382, inf
        %v388 = vsel %vm387, %v382, %v386
        %vm389 = vcmp.eq.f32.partialorder %v382, 0.0
        %v390 = vand.u32 %v382, 2147483648
        %v391 = vsel %vm389, %v390, %v388
        %v392 = vrsqrt.pop %v383
        %v393 = vmul.f32 %v383, %v392
        %vm394 = vcmp.eq.f32.partialorder %v383, inf
        %v395 = vsel %vm394, %v383, %v393
        %vm396 = vcmp.eq.f32.partialorder %v383, 0.0
        %v397 = vand.u32 %v383, 2147483648
        %v398 = vsel %vm396, %v397, %v395
        %v399 = vrsqrt.pop %v384
        %v400 = vmul.f32 %v384, %v399
        %vm401 = vcmp.eq.f32.partialorder %v384, inf
        %v402 = vsel %vm401, %v384, %v400
        %vm403 = vcmp.eq.f32.partialorder %v384, 0.0
        %v404 = vand.u32 %v384, 2147483648
        %v405 = vsel %vm403, %v404, %v402
        %p406 = scmp.eq.s32.totalorder %s32, 0
        // Predicated region
        $region53: #{tpu_custom_call.1} parent=35 // pred_check
          %p407 = pneg %p406
        $region54: #{tpu_custom_call.1} parent=35 // pred_check_branch
          %409 = sbr.rel (%p407) target = $region56
        $region55: #{tpu_custom_call.1} parent=35 // pred_region
          %v410 = vlaneseq
          %v411 = vshrl.u32 %v410, 7
          %v412 = vlaneseq
          %v413 = vand.u32 %v412, 127
          %v414 = vmul.u32 %v411, 128
          %v415 = vadd.s32 %v414, %v413
          %vm416 = vcmp.lt.s32.totalorder %v415, 256
          %v417 = vsel %vm416, 1, 0
          %vm418 = vcmp.eq.s32.totalorder %v417, 1
          %v419 = vsel %vm418, %v391, 0.0
          %v420 = vsel %vm418, %v398, 0.0
          %v421 = vsel %vm418, %v405, 0.0
          %v422 = vadd.f32 %v419, %v420
          %v423 = vadd.f32 %v422, %v421
          %v424 = vadd.f32 %v423, 0.0
          %425 = vst [vmem:[%s355] sm:$0xff] %v424
        $region56: #{tpu_custom_call.1} parent=35 // pred_fallthru
          _
        %s426 = sand.u32 %s161, 1
        %s427 = scalar_lea.sflag [#allocation4], %s426
        %s428 = sand.u32 %s161, 1
        %s429 = smul.addr %s428, 8
        %s430 = scalar_lea.vmem [#allocation10], %s429
        // Predicated region
        $region57: #{tpu_custom_call.1} parent=35 // pred_check
          %p431 = pneg %p171
        $region58: #{tpu_custom_call.1} parent=35 // pred_check_branch
          %433 = sbr.rel (%p431) target = $region60
        $region59: #{tpu_custom_call.1} parent=35 // pred_region
          %s435 = ssub.s32 128, 128
          %436 = vsyncadd %s427, %s435
          %s437 = sadd.s32 %s32, %s31
          %s438 = smul.addr %s437, 128
          %s439 = scalar_lea.hbm %s4, %s438
          %s441 = sshll.u32 %s430, 4
          %s442 = int_to_ptr.vmem [resolvable:$true] %s441
          %444 = dma.vmem_to_hbm [thread:$0]  %s442, 128, %s439, %s427
        $region60: #{tpu_custom_call.1} parent=35 // pred_fallthru
          _
      $region36: #{tpu_custom_call.1} parent=5 // pred_fallthru
        _
      %p445 = scmp.le.s32.totalorder 2, %s22
      // Predicated region
      $region61: #{tpu_custom_call.1} parent=5 // pred_check
        %p446 = pneg %p445
      $region62: #{tpu_custom_call.1} parent=5 // pred_check_branch
        %448 = sbr.rel (%p446) target = $region64
      $region63: #{tpu_custom_call.1} parent=5 // pred_region
        %s449 = ssub.s32 %s22, 2
        // Predicated region
        $region65: #{tpu_custom_call.1} parent=63 // pred_check
          %p450 = pneg %p177
        $region66: #{tpu_custom_call.1} parent=63 // pred_check_branch
          %452 = sbr.rel (%p450) target = $region68
        $region67: #{tpu_custom_call.1} parent=63 // pred_region
          %s453 = sand.u32 %s162, 1
          %s454 = scalar_lea.sflag [#allocation4], %s453
          %s455 = sand.u32 %s162, 1
          %s456 = smul.addr %s455, 8
          %s457 = scalar_lea.vmem [#allocation10], %s456
          %458 = dma.done %s454, 128
        $region68: #{tpu_custom_call.1} parent=63 // pred_fallthru
          _
      $region64: #{tpu_custom_call.1} parent=5 // pred_fallthru
        _
    $region6: #{tpu_custom_call.1} parent=1 // loop_footer
      %s26 = sadd.s32 1, %s22
    $region7: #{tpu_custom_call.1} parent=1 // loop_footer_branch
      %21 = sbr.rel target = $region3
    $region8: #{tpu_custom_call.1} parent=1 // loop_exit
      _
    %459 = vsyncpa [#allocation3], 1
    %s460 = scalar_lea.sflag [#allocation3], 1
    %461 = vsyncpa %s460, 1
    %462 = vsyncpa [#allocation6], 1
    %s463 = scalar_lea.sflag [#allocation6], 1
    %464 = vsyncpa %s463, 1
    %465 = vsyncpa [#allocation9], 1
    %s466 = scalar_lea.sflag [#allocation9], 1
    %467 = vsyncpa %s466, 1
    %468 = vsyncpa [#allocation4], 1
    %s469 = scalar_lea.sflag [#allocation4], 1
    %470 = vsyncpa %s469, 1

</llo_original>
